<compile_context>
chip_gen: v6e
topology: v6e:2x2x1
jax: 0.10.0
libtpu: 0.0.40
codegen_flags: <defaults>
</compile_context>

<pallas_src>
import functools

import numpy as np
import jax
import jax.numpy as jnp
from jax.experimental import pallas as pl
from jax.experimental.pallas import tpu as pltpu

# --- constants standing in for cfg['eval'] --------------------------------
ANGLE_THRESH_DEG = 30.0
DIST_THRESH = 0.1
_COS_THRESH = float(np.cos(ANGLE_THRESH_DEG / 180.0 * np.pi))
_DIST_THRESH_SQ = float(DIST_THRESH * DIST_THRESH)

_MAX_TILE_N = 2048  # lanes per tile; multiple of 128; double-buffered input
                    # tiles stay far under the scoped VMEM limit on v5e/v6e/v7x.


def _offset_loss_kernel(pred_ref, gt_ref, out_ref,
                        cos_acc, sl1_acc, hit_acc, *, n_rows, n_cols):
    """pred_ref/gt_ref: (C, TN) tile. out_ref: (1, 128) packed scalars."""
    i = pl.program_id(0)
    tile_n = pred_ref.shape[1]

    @pl.when(i == 0)
    def _init():
        cos_acc[...] = jnp.zeros_like(cos_acc)
        sl1_acc[...] = jnp.zeros_like(sl1_acc)
        hit_acc[...] = jnp.zeros_like(hit_acc)

    # Statically unrolled reduction over the tiny C axis: pure VPU elementwise.
    dot = None    # sum_c pred*gt              (1, TN)
    dist2 = None  # sum_c (pred-gt)^2          (1, TN)
    sl1 = None    # sum_c smooth_l1(pred-gt)   (1, TN)
    for c in range(n_cols):
        p = pred_ref[c:c + 1, :].astype(jnp.float32)
        g = gt_ref[c:c + 1, :].astype(jnp.float32)
        d = p - g
        ad = jnp.abs(d)
        s = jnp.where(ad < 1.0, 0.5 * d * d, ad - 0.5)  # SmoothL1, beta=1
        if c == 0:
            dot, dist2, sl1 = p * g, d * d, s
        else:
            dot = dot + p * g
            dist2 = dist2 + d * d
            sl1 = sl1 + s

    cosine = jnp.abs(dot)                                          # (1, TN)
    hit = jnp.logical_and(cosine > _COS_THRESH, dist2 < _DIST_THRESH_SQ)

    # Mask lanes that are padding (N rounded up to a multiple of TN).
    col = jax.lax.broadcasted_iota(jnp.int32, (1, tile_n), 1) + i * tile_n
    valid = col < n_rows

    cos_acc[...] += jnp.where(valid, cosine, 0.0)
    sl1_acc[...] += jnp.where(valid, sl1, 0.0)
    hit_acc[...] += jnp.where(jnp.logical_and(valid, hit), 1.0, 0.0)

    @pl.when(i == pl.num_programs(0) - 1)
    def _finalize():
        # The only cross-lane (XLU) reductions in the kernel — once per call.
        sum_cos = jnp.sum(cos_acc[...])
        sum_sl1 = jnp.sum(sl1_acc[...])
        sum_hit = jnp.sum(hit_acc[...])
        inv_n = 1.0 / float(n_rows)
        cosine_loss = -sum_cos * inv_n
        position_loss = sum_sl1 * (1.0 / float(n_rows * n_cols))
        total_loss = cosine_loss + 1000.0 * position_loss
        offset_acc = sum_hit * inv_n
        # Pack both scalars into one full (1, 128) lane-dense row.
        lane = jax.lax.broadcasted_iota(jnp.int32, (1, 128), 1)
        out_ref[...] = jnp.where(
            lane == 0, total_loss,
            jnp.where(lane == 1, offset_acc, 0.0)).astype(jnp.float32)


def offset_loss(pred_off, gt_off):
    """pred_off, gt_off: (N, C) float32 -> (loss scalar, offset_acc scalar)."""
    n, c = pred_off.shape

    # Lane-dense layout: (C, N_pad), N padded to a multiple of the tile width.
    tile_n = min(_MAX_TILE_N, ((n + 127) // 128) * 128)
    n_pad = ((n + tile_n - 1) // tile_n) * tile_n
    pred_t = jnp.pad(pred_off.T, ((0, 0), (0, n_pad - n)))
    gt_t = jnp.pad(gt_off.T, ((0, 0), (0, n_pad - n)))

    kernel = functools.partial(_offset_loss_kernel, n_rows=n, n_cols=c)
    out = pl.pallas_call(
        kernel,
        out_shape=jax.ShapeDtypeStruct((1, 128), jnp.float32),
        grid=(n_pad // tile_n,),
        in_specs=[
            pl.BlockSpec((c, tile_n), lambda i: (0, i)),
            pl.BlockSpec((c, tile_n), lambda i: (0, i)),
        ],
        out_specs=pl.BlockSpec((1, 128), lambda i: (0, 0)),
        scratch_shapes=[
            pltpu.VMEM((1, tile_n), jnp.float32),
            pltpu.VMEM((1, tile_n), jnp.float32),
            pltpu.VMEM((1, tile_n), jnp.float32),
        ],
        compiler_params=pltpu.CompilerParams(
            dimension_semantics=("arbitrary",)),
    )(pred_t, gt_t)
    return out[0, 0], out[0, 1]


def _reference(pred_off, gt_off):
    # Pure-jnp reference mirroring the PyTorch forward.
    cosine = jnp.abs(jnp.sum(pred_off * gt_off, axis=1))
    cosine_loss = -jnp.sum(cosine) / pred_off.shape[0]
    diff = pred_off - gt_off
    absd = jnp.abs(diff)
    position_loss = jnp.mean(jnp.where(absd < 1.0, 0.5 * diff * diff, absd - 0.5))
    cos_acc = cosine > _COS_THRESH
    pos_acc = jnp.linalg.norm(diff, axis=1) < DIST_THRESH
    acc = jnp.sum(cos_acc & pos_acc) / pred_off.shape[0]
    return cosine_loss + 1000.0 * position_loss, acc.astype(jnp.float32)


if __name__ == "__main__":
    key = jax.random.PRNGKey(0)

    def make_inputs(k, n, c, noise):
        k1, k2 = jax.random.split(k)
        pred = jax.random.normal(k1, (n, c), dtype=jnp.float32)
        pred = pred / jnp.linalg.norm(pred, axis=1, keepdims=True)
        gt = pred + noise * jax.random.normal(k2, (n, c), dtype=jnp.float32)
        gt = gt / jnp.linalg.norm(gt, axis=1, keepdims=True)
        return pred, gt

    # Small production-like shape (single padded tile) and a larger batch that
    # exercises multi-tile accumulation plus lane-padding masking.
    for n, c, noise in [(8, 3, 0.05), (3000, 3, 0.08)]:
        k, key = jax.random.split(key)
        pred, gt = make_inputs(k, n, c, noise)

        loss, acc = offset_loss(pred, gt)
        jax.block_until_ready((loss, acc))

        ref_loss, ref_acc = _reference(pred, gt)
        assert np.allclose(np.asarray(loss), np.asarray(ref_loss),
                           rtol=1e-4, atol=1e-4), (n, float(loss), float(ref_loss))
        assert np.allclose(np.asarray(acc), np.asarray(ref_acc),
                           rtol=1e-5, atol=1e-5), (n, float(acc), float(ref_acc))

    print("KERNEL_OK")
</pallas_src>

<mosaic_0001>
module attributes {stable_mosaic.version = 11 : i64} {
  func.func @_offset_loss_kernel(%arg0: i32, %arg1: memref<3x128xf32, #tpu.memory_space<vmem>>, %arg2: memref<3x128xf32, #tpu.memory_space<vmem>>, %arg3: memref<1x128xf32, #tpu.memory_space<vmem>>, %arg4: memref<1x128xf32, #tpu.memory_space<vmem>>, %arg5: memref<1x128xf32, #tpu.memory_space<vmem>>, %arg6: memref<1x128xf32, #tpu.memory_space<vmem>>) attributes {dimension_semantics = [#tpu.dimension_semantics<arbitrary>], iteration_bounds = array<i64: 1>, scalar_prefetch = 0 : i64, scratch_operands = 3 : i64, tpu.core_type = #tpu.core_type<tc>, window_params = [{transform_indices = @transform_0, window_bounds = array<i64: 3, 128>}, {transform_indices = @transform_1, window_bounds = array<i64: 3, 128>}, {pipeline_mode = #tpu.pipeline_mode<synchronous>, transform_indices = @transform_2, window_bounds = array<i64: 1, 128>}]} {
    %c0_i32 = arith.constant 0 : i32
    %0 = arith.cmpi eq, %arg0, %c0_i32 : i32
    %1 = arith.extui %0 : i1 to i32
    %c0_i32_0 = arith.constant 0 : i32
    %2 = arith.cmpi ne, %1, %c0_i32_0 : i32
    scf.if %2 {
      %cst_38 = arith.constant 0.000000e+00 : f32
      %83 = vector.broadcast %cst_38 : f32 to vector<1x128xf32>
      %c0_39 = arith.constant 0 : index
      %c0_40 = arith.constant 0 : index
      %84 = vector.load %arg4[%c0_39, %c0_40] : memref<1x128xf32, #tpu.memory_space<vmem>>, vector<1x128xf32>
      tpu.vector_store %arg4[%c0_39, %c0_40], %83 {strides = array<i32>} : memref<1x128xf32, #tpu.memory_space<vmem>>, vector<1x128xf32>,
      %cst_41 = arith.constant 0.000000e+00 : f32
      %85 = vector.broadcast %cst_41 : f32 to vector<1x128xf32>
      %c0_42 = arith.constant 0 : index
      %c0_43 = arith.constant 0 : index
      %86 = vector.load %arg5[%c0_42, %c0_43] : memref<1x128xf32, #tpu.memory_space<vmem>>, vector<1x128xf32>
      tpu.vector_store %arg5[%c0_42, %c0_43], %85 {strides = array<i32>} : memref<1x128xf32, #tpu.memory_space<vmem>>, vector<1x128xf32>,
      %cst_44 = arith.constant 0.000000e+00 : f32
      %87 = vector.broadcast %cst_44 : f32 to vector<1x128xf32>
      %c0_45 = arith.constant 0 : index
      %c0_46 = arith.constant 0 : index
      %88 = vector.load %arg6[%c0_45, %c0_46] : memref<1x128xf32, #tpu.memory_space<vmem>>, vector<1x128xf32>
      tpu.vector_store %arg6[%c0_45, %c0_46], %87 {strides = array<i32>} : memref<1x128xf32, #tpu.memory_space<vmem>>, vector<1x128xf32>,
    } else {
    }
    %c0 = arith.constant 0 : index
    %c0_1 = arith.constant 0 : index
    %3 = vector.load %arg1[%c0, %c0_1] : memref<3x128xf32, #tpu.memory_space<vmem>>, vector<1x128xf32>
    %c0_2 = arith.constant 0 : index
    %c0_3 = arith.constant 0 : index
    %4 = vector.load %arg2[%c0_2, %c0_3] : memref<3x128xf32, #tpu.memory_space<vmem>>, vector<1x128xf32>
    %5 = arith.subf %3, %4 : vector<1x128xf32>
    %6 = math.absf %5 : vector<1x128xf32>
    %cst = arith.constant 1.000000e+00 : f32
    %7 = vector.broadcast %cst : f32 to vector<1x128xf32>
    %8 = arith.cmpf olt, %6, %7 : vector<1x128xf32>
    %cst_4 = arith.constant 5.000000e-01 : f32
    %9 = vector.broadcast %cst_4 : f32 to vector<1x128xf32>
    %10 = arith.mulf %9, %5 : vector<1x128xf32>
    %11 = arith.mulf %10, %5 : vector<1x128xf32>
    %cst_5 = arith.constant 5.000000e-01 : f32
    %12 = vector.broadcast %cst_5 : f32 to vector<1x128xf32>
    %13 = arith.subf %6, %12 : vector<1x128xf32>
    %14 = arith.select %8, %11, %13 : vector<1x128xi1>, vector<1x128xf32>
    %15 = arith.mulf %3, %4 : vector<1x128xf32>
    %16 = arith.mulf %5, %5 : vector<1x128xf32>
    %c1 = arith.constant 1 : index
    %c0_6 = arith.constant 0 : index
    %17 = vector.load %arg1[%c1, %c0_6] : memref<3x128xf32, #tpu.memory_space<vmem>>, vector<1x128xf32>
    %c1_7 = arith.constant 1 : index
    %c0_8 = arith.constant 0 : index
    %18 = vector.load %arg2[%c1_7, %c0_8] : memref<3x128xf32, #tpu.memory_space<vmem>>, vector<1x128xf32>
    %19 = arith.subf %17, %18 : vector<1x128xf32>
    %20 = math.absf %19 : vector<1x128xf32>
    %cst_9 = arith.constant 1.000000e+00 : f32
    %21 = vector.broadcast %cst_9 : f32 to vector<1x128xf32>
    %22 = arith.cmpf olt, %20, %21 : vector<1x128xf32>
    %cst_10 = arith.constant 5.000000e-01 : f32
    %23 = vector.broadcast %cst_10 : f32 to vector<1x128xf32>
    %24 = arith.mulf %23, %19 : vector<1x128xf32>
    %25 = arith.mulf %24, %19 : vector<1x128xf32>
    %cst_11 = arith.constant 5.000000e-01 : f32
    %26 = vector.broadcast %cst_11 : f32 to vector<1x128xf32>
    %27 = arith.subf %20, %26 : vector<1x128xf32>
    %28 = arith.select %22, %25, %27 : vector<1x128xi1>, vector<1x128xf32>
    %29 = arith.mulf %17, %18 : vector<1x128xf32>
    %30 = arith.addf %15, %29 : vector<1x128xf32>
    %31 = arith.mulf %19, %19 : vector<1x128xf32>
    %32 = arith.addf %16, %31 : vector<1x128xf32>
    %33 = arith.addf %14, %28 : vector<1x128xf32>
    %c2 = arith.constant 2 : index
    %c0_12 = arith.constant 0 : index
    %34 = vector.load %arg1[%c2, %c0_12] : memref<3x128xf32, #tpu.memory_space<vmem>>, vector<1x128xf32>
    %c2_13 = arith.constant 2 : index
    %c0_14 = arith.constant 0 : index
    %35 = vector.load %arg2[%c2_13, %c0_14] : memref<3x128xf32, #tpu.memory_space<vmem>>, vector<1x128xf32>
    %36 = arith.subf %34, %35 : vector<1x128xf32>
    %37 = math.absf %36 : vector<1x128xf32>
    %cst_15 = arith.constant 1.000000e+00 : f32
    %38 = vector.broadcast %cst_15 : f32 to vector<1x128xf32>
    %39 = arith.cmpf olt, %37, %38 : vector<1x128xf32>
    %cst_16 = arith.constant 5.000000e-01 : f32
    %40 = vector.broadcast %cst_16 : f32 to vector<1x128xf32>
    %41 = arith.mulf %40, %36 : vector<1x128xf32>
    %42 = arith.mulf %41, %36 : vector<1x128xf32>
    %cst_17 = arith.constant 5.000000e-01 : f32
    %43 = vector.broadcast %cst_17 : f32 to vector<1x128xf32>
    %44 = arith.subf %37, %43 : vector<1x128xf32>
    %45 = arith.select %39, %42, %44 : vector<1x128xi1>, vector<1x128xf32>
    %46 = arith.mulf %34, %35 : vector<1x128xf32>
    %47 = arith.addf %30, %46 : vector<1x128xf32>
    %48 = arith.mulf %36, %36 : vector<1x128xf32>
    %49 = arith.addf %32, %48 : vector<1x128xf32>
    %50 = arith.addf %33, %45 : vector<1x128xf32>
    %51 = math.absf %47 : vector<1x128xf32>
    %cst_18 = arith.constant 0.866025388 : f32
    %52 = vector.broadcast %cst_18 : f32 to vector<1x128xf32>
    %53 = arith.cmpf ogt, %51, %52 : vector<1x128xf32>
    %cst_19 = arith.constant 0.00999999977 : f32
    %54 = vector.broadcast %cst_19 : f32 to vector<1x128xf32>
    %55 = arith.cmpf olt, %49, %54 : vector<1x128xf32>
    %56 = arith.andi %53, %55 : vector<1x128xi1>
    %57 = tpu.iota {dimensions = array<i32: 1>} : vector<1x128xi32>
    %c128_i32 = arith.constant 128 : i32
    %58 = arith.muli %arg0, %c128_i32 : i32
    %59 = vector.broadcast %58 : i32 to vector<1x128xi32>
    %60 = arith.addi %57, %59 : vector<1x128xi32>
    %c8_i32 = arith.constant 8 : i32
    %61 = vector.broadcast %c8_i32 : i32 to vector<1x128xi32>
    %62 = arith.cmpi slt, %60, %61 : vector<1x128xi32>
    %c0_20 = arith.constant 0 : index
    %c0_21 = arith.constant 0 : index
    %63 = vector.load %arg4[%c0_20, %c0_21] : memref<1x128xf32, #tpu.memory_space<vmem>>, vector<1x128xf32>
    %cst_22 = arith.constant 0.000000e+00 : f32
    %64 = vector.broadcast %cst_22 : f32 to vector<1x128xf32>
    %65 = arith.select %62, %51, %64 : vector<1x128xi1>, vector<1x128xf32>
    %66 = arith.addf %63, %65 : vector<1x128xf32>
    %c0_23 = arith.constant 0 : index
    %c0_24 = arith.constant 0 : index
    %67 = vector.load %arg4[%c0_23, %c0_24] : memref<1x128xf32, #tpu.memory_space<vmem>>, vector<1x128xf32>
    tpu.vector_store %arg4[%c0_23, %c0_24], %66 {strides = array<i32>} : memref<1x128xf32, #tpu.memory_space<vmem>>, vector<1x128xf32>,
    %c0_25 = arith.constant 0 : index
    %c0_26 = arith.constant 0 : index
    %68 = vector.load %arg5[%c0_25, %c0_26] : memref<1x128xf32, #tpu.memory_space<vmem>>, vector<1x128xf32>
    %cst_27 = arith.constant 0.000000e+00 : f32
    %69 = vector.broadcast %cst_27 : f32 to vector<1x128xf32>
    %70 = arith.select %62, %50, %69 : vector<1x128xi1>, vector<1x128xf32>
    %71 = arith.addf %68, %70 : vector<1x128xf32>
    %c0_28 = arith.constant 0 : index
    %c0_29 = arith.constant 0 : index
    %72 = vector.load %arg5[%c0_28, %c0_29] : memref<1x128xf32, #tpu.memory_space<vmem>>, vector<1x128xf32>
    tpu.vector_store %arg5[%c0_28, %c0_29], %71 {strides = array<i32>} : memref<1x128xf32, #tpu.memory_space<vmem>>, vector<1x128xf32>,
    %c0_30 = arith.constant 0 : index
    %c0_31 = arith.constant 0 : index
    %73 = vector.load %arg6[%c0_30, %c0_31] : memref<1x128xf32, #tpu.memory_space<vmem>>, vector<1x128xf32>
    %74 = arith.andi %62, %56 : vector<1x128xi1>
    %cst_32 = arith.constant 1.000000e+00 : f32
    %cst_33 = arith.constant 0.000000e+00 : f32
    %75 = vector.broadcast %cst_32 : f32 to vector<1x128xf32>
    %76 = vector.broadcast %cst_33 : f32 to vector<1x128xf32>
    %77 = arith.select %74, %75, %76 : vector<1x128xi1>, vector<1x128xf32>
    %78 = arith.addf %73, %77 : vector<1x128xf32>
    %c0_34 = arith.constant 0 : index
    %c0_35 = arith.constant 0 : index
    %79 = vector.load %arg6[%c0_34, %c0_35] : memref<1x128xf32, #tpu.memory_space<vmem>>, vector<1x128xf32>
    tpu.vector_store %arg6[%c0_34, %c0_35], %78 {strides = array<i32>} : memref<1x128xf32, #tpu.memory_space<vmem>>, vector<1x128xf32>,
    %c0_i32_36 = arith.constant 0 : i32
    %80 = arith.cmpi eq, %arg0, %c0_i32_36 : i32
    %81 = arith.extui %80 : i1 to i32
    %c0_i32_37 = arith.constant 0 : i32
    %82 = arith.cmpi ne, %81, %c0_i32_37 : i32
    scf.if %82 {
      %c0_38 = arith.constant 0 : index
      %c0_39 = arith.constant 0 : index
      %83 = vector.load %arg4[%c0_38, %c0_39] : memref<1x128xf32, #tpu.memory_space<vmem>>, vector<1x128xf32>
      %84 = vector.shape_cast %83 : vector<1x128xf32> to vector<1x1x128xf32>
      %cst_40 = arith.constant dense<0.000000e+00> : vector<1xf32>
      %85 = vector.multi_reduction <add>, %84, %cst_40 [1, 2] : vector<1x1x128xf32> to vector<1xf32>
      %86 = vector.shape_cast %85 : vector<1xf32> to vector<1x1x1xf32>
      %87 = vector.extract %86[0, 0, 0] : f32 from vector<1x1x1xf32>
      %c0_41 = arith.constant 0 : index
      %c0_42 = arith.constant 0 : index
      %88 = vector.load %arg5[%c0_41, %c0_42] : memref<1x128xf32, #tpu.memory_space<vmem>>, vector<1x128xf32>
      %89 = vector.shape_cast %88 : vector<1x128xf32> to vector<1x1x128xf32>
      %cst_43 = arith.constant dense<0.000000e+00> : vector<1xf32>
      %90 = vector.multi_reduction <add>, %89, %cst_43 [1, 2] : vector<1x1x128xf32> to vector<1xf32>
      %91 = vector.shape_cast %90 : vector<1xf32> to vector<1x1x1xf32>
      %92 = vector.extract %91[0, 0, 0] : f32 from vector<1x1x1xf32>
      %c0_44 = arith.constant 0 : index
      %c0_45 = arith.constant 0 : index
      %93 = vector.load %arg6[%c0_44, %c0_45] : memref<1x128xf32, #tpu.memory_space<vmem>>, vector<1x128xf32>
      %94 = vector.shape_cast %93 : vector<1x128xf32> to vector<1x1x128xf32>
      %cst_46 = arith.constant dense<0.000000e+00> : vector<1xf32>
      %95 = vector.multi_reduction <add>, %94, %cst_46 [1, 2] : vector<1x1x128xf32> to vector<1xf32>
      %96 = vector.shape_cast %95 : vector<1xf32> to vector<1x1x1xf32>
      %97 = vector.extract %96[0, 0, 0] : f32 from vector<1x1x1xf32>
      %cst_47 = arith.constant 0.000000e+00 : f32
      %98 = arith.subf %cst_47, %87 : f32
      %cst_48 = arith.constant 1.250000e-01 : f32
      %99 = arith.mulf %98, %cst_48 : f32
      %cst_49 = arith.constant 0.0416666679 : f32
      %100 = arith.mulf %92, %cst_49 : f32
      %cst_50 = arith.constant 1.000000e+03 : f32
      %101 = arith.mulf %cst_50, %100 : f32
      %102 = arith.addf %99, %101 : f32
      %cst_51 = arith.constant 1.250000e-01 : f32
      %103 = arith.mulf %97, %cst_51 : f32
      %104 = tpu.iota {dimensions = array<i32: 1>} : vector<1x128xi32>
      %c0_i32_52 = arith.constant 0 : i32
      %105 = vector.broadcast %c0_i32_52 : i32 to vector<1x128xi32>
      %106 = arith.cmpi eq, %104, %105 : vector<1x128xi32>
      %c1_i32 = arith.constant 1 : i32
      %107 = vector.broadcast %c1_i32 : i32 to vector<1x128xi32>
      %108 = arith.cmpi eq, %104, %107 : vector<1x128xi32>
      %cst_53 = arith.constant 0.000000e+00 : f32
      %109 = vector.broadcast %103 : f32 to vector<1x128xf32>
      %110 = vector.broadcast %cst_53 : f32 to vector<1x128xf32>
      %111 = arith.select %108, %109, %110 : vector<1x128xi1>, vector<1x128xf32>
      %112 = vector.broadcast %102 : f32 to vector<1x128xf32>
      %113 = arith.select %106, %112, %111 : vector<1x128xi1>, vector<1x128xf32>
      %c0_54 = arith.constant 0 : index
      %c0_55 = arith.constant 0 : index
      %114 = vector.load %arg3[%c0_54, %c0_55] : memref<1x128xf32, #tpu.memory_space<vmem>>, vector<1x128xf32>
      tpu.vector_store %arg3[%c0_54, %c0_55], %113 {strides = array<i32>} : memref<1x128xf32, #tpu.memory_space<vmem>>, vector<1x128xf32>,
    } else {
    }
    return
  }
  func.func @transform_0(%arg0: i32) -> (i32, i32) {
    %c0_i32 = arith.constant 0 : i32
    %c0_i32_0 = arith.constant 0 : i32
    return %c0_i32, %arg0 : i32, i32
  }
  func.func @transform_1(%arg0: i32) -> (i32, i32) {
    %c0_i32 = arith.constant 0 : i32
    %c0_i32_0 = arith.constant 0 : i32
    return %c0_i32, %arg0 : i32, i32
  }
  func.func @transform_2(%arg0: i32) -> (i32, i32) {
    %c0_i32 = arith.constant 0 : i32
    %c0_i32_0 = arith.constant 0 : i32
    %c0_i32_1 = arith.constant 0 : i32
    return %c0_i32, %c0_i32_0 : i32, i32
  }
}

</mosaic_0001>

<llo_original>
// kernel: tpu_custom_call.1
$region0: #{tpu_custom_call.1}
  #allocation0 [shape = 'u32[]', space=smem, size = 0x4, offset = 0x4, fixed_abs, tag = 'smem constant byte address 0x4 - core index']
  #allocation1 [shape = 'u32[144,128]{1,0:T(1,128)}', space=vmem, size = 0x12000, scoped, tag = 'internal scratch']
  #allocation2 [shape = 'f32[1,128]{1,0:T(1,128)}', space=vmem, size = 0x200, scoped, tag = 'scratch operand']
  #allocation3 [shape = 'f32[1,128]{1,0:T(1,128)}', space=vmem, size = 0x200, scoped, tag = 'scratch operand']
  #allocation4 [shape = 'f32[1,128]{1,0:T(1,128)}', space=vmem, size = 0x200, scoped, tag = 'scratch operand']
  %s0 = inlined_call_operand.hbm [shape: f32[3,128], index: 0, kind: input, shape index: {}]
  %s1 = inlined_call_operand.hbm [shape: f32[3,128], index: 1, kind: input, shape index: {}]
  %s2 = inlined_call_operand.hbm [shape: f32[1,128], index: 2, kind: output, shape index: {}]
  %s3 = sld [smem:[#allocation0]]
  $region34: #{tpu_custom_call.1} parent=0
    _
  %s5 = ssub.s32 1, %s3
  %s6 = scalar_select 0, %s5, %s3
  $region1: #{tpu_custom_call.1} parent=0
    #allocation5 [shape = 'u8[2048]{0}', space=vmem, size = 0x800, scoped, tag = 'input window, operand 0, single buffered']
    #allocation6 [shape = 's32[1]{0}', space=sflag, size = 0x4, scoped, tag = 'scoped memory for tpu_custom_call.1']
    #allocation7 [shape = 's32[1]{0}', space=sflag, size = 0x4, scoped, tag = 'scoped memory for tpu_custom_call.1']
    #allocation8 [shape = 'u8[2048]{0}', space=vmem, size = 0x800, scoped, tag = 'input window, operand 1, single buffered']
    #allocation9 [shape = 's32[1]{0}', space=sflag, size = 0x4, scoped, tag = 'scoped memory for tpu_custom_call.1']
    #allocation10 [shape = 'u8[512]{0}', space=vmem, size = 0x400, scoped, tag = 'output window, operand 0, single buffered']
    %7 = vsyncpa [#allocation6], 0
    %8 = vsyncpa [#allocation9], 0
    %9 = vsyncpa [#allocation7], 0
    // Predicated region
    $region2: #{tpu_custom_call.1} parent=1 // pred_check
      _
    $region3: #{tpu_custom_call.1} parent=1 // pred_check_branch
      %11 = sbr.rel (0) target = $region5
    $region4: #{tpu_custom_call.1} parent=1 // pred_region
      %s13 = ssub.s32 64, 64
      %14 = vsyncadd [#allocation6], %s13
      %s16 = sshll.u32 [#allocation5], 4
      %s17 = int_to_ptr.vmem [resolvable:$true] %s16
      %19 = dma.hbm_to_vmem [thread:$0]  %s0, 64, %s17, [#allocation6]
    $region5: #{tpu_custom_call.1} parent=1 // pred_fallthru
      _
    // Predicated region
    $region6: #{tpu_custom_call.1} parent=1 // pred_check
      _
    $region7: #{tpu_custom_call.1} parent=1 // pred_check_branch
      %21 = sbr.rel (0) target = $region9
    $region8: #{tpu_custom_call.1} parent=1 // pred_region
      %s23 = ssub.s32 64, 64
      %24 = vsyncadd [#allocation9], %s23
      %s26 = sshll.u32 [#allocation8], 4
      %s27 = int_to_ptr.vmem [resolvable:$true] %s26
      %29 = dma.hbm_to_vmem [thread:$0]  %s1, 64, %s27, [#allocation9]
    $region9: #{tpu_custom_call.1} parent=1 // pred_fallthru
      _
    // Predicated region
    $region10: #{tpu_custom_call.1} parent=1 // pred_check
      _
    $region11: #{tpu_custom_call.1} parent=1 // pred_check_branch
      %31 = sbr.rel (0) target = $region13
    $region12: #{tpu_custom_call.1} parent=1 // pred_region
      %32 = dma.done [#allocation6], 64
    $region13: #{tpu_custom_call.1} parent=1 // pred_fallthru
      _
    // Predicated region
    $region14: #{tpu_custom_call.1} parent=1 // pred_check
      _
    $region15: #{tpu_custom_call.1} parent=1 // pred_check_branch
      %34 = sbr.rel (0) target = $region17
    $region16: #{tpu_custom_call.1} parent=1 // pred_region
      %35 = dma.done [#allocation9], 64
    $region17: #{tpu_custom_call.1} parent=1 // pred_fallthru
      _
    %p36 = scmp.eq.s32.totalorder 0, 0
    // Predicated region
    $region18: #{tpu_custom_call.1} parent=1 // pred_check
      %p37 = pneg %p36
    $region19: #{tpu_custom_call.1} parent=1 // pred_check_branch
      %39 = sbr.rel (%p37) target = $region21
    $region20: #{tpu_custom_call.1} parent=1 // pred_region
      %40 = vst [vmem:[#allocation2] sm:$0x1] 0.0
      %41 = vst [vmem:[#allocation3] sm:$0x1] 0.0
      %42 = vst [vmem:[#allocation4] sm:$0x1] 0.0
    $region21: #{tpu_custom_call.1} parent=1 // pred_fallthru
      _
    %v43 = vld [vmem:[#allocation5] sm:$0x1]
    %v44 = vld [vmem:[#allocation8] sm:$0x1]
    %v45 = vsub.f32 %v43, %v44
    %v46 = vand.u32 2147483647, %v45
    %vm47 = vcmp.lt.f32.partialorder %v46, 1.0
    %v48 = vmul.f32 %v45, 0.5
    %v49 = vmul.f32 %v48, %v45
    %v50 = vsub.f32 %v46, 0.5
    %v51 = vsel %vm47, %v49, %v50
    %v52 = vmul.f32 %v43, %v44
    %v53 = vmul.f32 %v45, %v45
    %v54 = vld [vmem:[#allocation5 + $0x1] sm:$0x1]
    %v55 = vld [vmem:[#allocation8 + $0x1] sm:$0x1]
    %v56 = vsub.f32 %v54, %v55
    %v57 = vand.u32 2147483647, %v56
    %vm58 = vcmp.lt.f32.partialorder %v57, 1.0
    %v59 = vmul.f32 %v56, 0.5
    %v60 = vmul.f32 %v59, %v56
    %v61 = vsub.f32 %v57, 0.5
    %v62 = vsel %vm58, %v60, %v61
    %v63 = vmul.f32 %v54, %v55
    %v64 = vadd.f32 %v52, %v63
    %v65 = vmul.f32 %v56, %v56
    %v66 = vadd.f32 %v53, %v65
    %v67 = vadd.f32 %v51, %v62
    %v68 = vld [vmem:[#allocation5 + $0x2] sm:$0x1]
    %v69 = vld [vmem:[#allocation8 + $0x2] sm:$0x1]
    %v70 = vsub.f32 %v68, %v69
    %v71 = vand.u32 2147483647, %v70
    %vm72 = vcmp.lt.f32.partialorder %v71, 1.0
    %v73 = vmul.f32 %v70, 0.5
    %v74 = vmul.f32 %v73, %v70
    %v75 = vsub.f32 %v71, 0.5
    %v76 = vsel %vm72, %v74, %v75
    %v77 = vmul.f32 %v68, %v69
    %v78 = vadd.f32 %v64, %v77
    %v79 = vmul.f32 %v70, %v70
    %v80 = vadd.f32 %v66, %v79
    %v81 = vadd.f32 %v67, %v76
    %v82 = vand.u32 2147483647, %v78
    %vm83 = vcmp.gt.f32.partialorder %v82, 0.8660254
    %vm84 = vcmp.lt.f32.partialorder %v80, 0.01
    %vm85 = vmand %vm83, %vm84
    %v86 = vlaneseq
    %v87 = vand.u32 %v86, 127
    %s88 = smul.u32 0, 128
    %v89 = vstv %s88
    %v90 = vadd.s32 %v87, %v89
    %vm91 = vcmp.lt.s32.totalorder %v90, 8
    %v92 = vld [vmem:[#allocation2] sm:$0x1]
    %v93 = vsel %vm91, %v82, 0.0
    %v94 = vadd.f32 %v92, %v93
    %95 = vst [vmem:[#allocation2] sm:$0x1] %v94
    %v96 = vld [vmem:[#allocation3] sm:$0x1]
    %v97 = vsel %vm91, %v81, 0.0
    %v98 = vadd.f32 %v96, %v97
    %99 = vst [vmem:[#allocation3] sm:$0x1] %v98
    %v100 = vld [vmem:[#allocation4] sm:$0x1]
    %vm101 = vmand %vm91, %vm85
    %v102 = vsel %vm101, 1.0, 0.0
    %v103 = vadd.f32 %v100, %v102
    %104 = vst [vmem:[#allocation4] sm:$0x1] %v103
    // Predicated region
    $region22: #{tpu_custom_call.1} parent=1 // pred_check
      %p105 = pneg %p36
    $region23: #{tpu_custom_call.1} parent=1 // pred_check_branch
      %107 = sbr.rel (%p105) target = $region25
    $region24: #{tpu_custom_call.1} parent=1 // pred_region
      %v108 = vld [vmem:[#allocation2] sm:$0x1]
      %vm109 = vcmask 1040384
      %v110 = vsel %vm109, %v108, 0.0
      %111 = vadd.xlane.f32.xlu0 %v110
      %v112 = vpop.xlane.xlu0 %111
      %v113 = vrot.slane %v112, 4
      %v114 = vadd.f32 %v112, %v113
      %v115 = vrot.slane %v114, 2
      %v116 = vadd.f32 %v114, %v115
      %v117 = vrot.slane %v116, 1
      %v118 = vadd.f32 %v116, %v117
      %s119 = vtos %v118
      %v120 = vld [vmem:[#allocation3] sm:$0x1]
      %v121 = vsel %vm109, %v120, 0.0
      %122 = vadd.xlane.f32.xlu0 %v121
      %v123 = vpop.xlane.xlu0 %122
      %v124 = vrot.slane %v123, 4
      %v125 = vadd.f32 %v123, %v124
      %v126 = vrot.slane %v125, 2
      %v127 = vadd.f32 %v125, %v126
      %v128 = vrot.slane %v127, 1
      %v129 = vadd.f32 %v127, %v128
      %s130 = vtos %v129
      %v131 = vld [vmem:[#allocation4] sm:$0x1]
      %v132 = vsel %vm109, %v131, 0.0
      %133 = vadd.xlane.f32.xlu0 %v132
      %v134 = vpop.xlane.xlu0 %133
      %v135 = vrot.slane %v134, 4
      %v136 = vadd.f32 %v134, %v135
      %v137 = vrot.slane %v136, 2
      %v138 = vadd.f32 %v136, %v137
      %v139 = vrot.slane %v138, 1
      %v140 = vadd.f32 %v138, %v139
      %s141 = vtos %v140
      %s142 = ssub.f32 0.0, %s119
      %s143 = smul.f32 %s142, 0.125
      %s144 = smul.f32 %s130, 0.041666668
      %s145 = smul.f32 %s144, 1000.0
      %s146 = sadd.f32 %s143, %s145
      %s147 = smul.f32 %s141, 0.125
      %vm148 = vcmp.eq.s32.totalorder %v87, 0
      %vm149 = vcmp.eq.s32.totalorder %v87, 1
      %v150 = vstv %s147
      %v151 = vsel %vm149, %v150, 0.0
      %v152 = vstv %s146
      %v153 = vsel %vm148, %v152, %v151
      %154 = vst [vmem:[#allocation10] sm:$0x1] %v153
    $region25: #{tpu_custom_call.1} parent=1 // pred_fallthru
      _
    // Predicated region
    $region26: #{tpu_custom_call.1} parent=1 // pred_check
      _
    $region27: #{tpu_custom_call.1} parent=1 // pred_check_branch
      %156 = sbr.rel (0) target = $region29
    $region28: #{tpu_custom_call.1} parent=1 // pred_region
      %s158 = ssub.s32 16, 16
      %159 = vsyncadd [#allocation7], %s158
      %s161 = sshll.u32 [#allocation10], 4
      %s162 = int_to_ptr.vmem [resolvable:$true] %s161
      %164 = dma.vmem_to_hbm [thread:$0]  %s162, 16, %s2, [#allocation7]
    $region29: #{tpu_custom_call.1} parent=1 // pred_fallthru
      _
    // Predicated region
    $region30: #{tpu_custom_call.1} parent=1 // pred_check
      _
    $region31: #{tpu_custom_call.1} parent=1 // pred_check_branch
      %166 = sbr.rel (0) target = $region33
    $region32: #{tpu_custom_call.1} parent=1 // pred_region
      %167 = dma.done [#allocation7], 16
    $region33: #{tpu_custom_call.1} parent=1 // pred_fallthru
      _
    %168 = vsyncpa [#allocation6], 1
    %169 = vsyncpa [#allocation9], 1
    %170 = vsyncpa [#allocation7], 1

</llo_original>
